<compile_context>
chip_gen: v7x
topology: tpu7x:2x2x1
jax: 0.10.0
libtpu: 0.0.40
codegen_flags: <defaults>
</compile_context>

<pallas_src>
import functools

import jax
import jax.numpy as jnp
from jax.experimental import pallas as pl
from jax.experimental.pallas import tpu as pltpu

E11_ID = 30522   # entity-1 start marker token id (as in the PyTorch code)
E21_ID = 30524   # entity-2 start marker token id


# ----------------------------- Pallas kernels ------------------------------

def _encode_pool_kernel(x_ref, w_ref, b_ref, own_ref, wgt_ref, o_ref):
    """Fused token-wise encoder + owner-indexed pooled accumulation.

    x:   [tile_m, H]   bf16 token rows
    w:   [H, tile_h]   bf16 encoder weight (column block)
    b:   [1, tile_h]   f32 bias
    own: [1, tile_m]   int32 owner output-row of each token (-1 = none / padding)
    wgt: [1, tile_m]   f32 pooling weight of each token (attention mask or 1)
    o:   [R, tile_h]   f32 accumulator output:  o[r] += sum_{own==r} wgt * hid
    """
    m = pl.program_id(1)                     # token-tile axis carries the reduction

    @pl.when(m == 0)
    def _init():
        o_ref[...] = jnp.zeros_like(o_ref)

    hid = jnp.tanh(
        jnp.dot(x_ref[...], w_ref[...], preferred_element_type=jnp.float32)
        + b_ref[...]
    )                                                       # [tile_m, tile_h] f32

    # Rebuild the 0/1 (masked) pooling slab in-registers from the tiny owner /
    # weight vectors -- the dense [R, M] pooling matrix never touches HBM.
    r = o_ref.shape[0]
    tile_m = x_ref.shape[0]
    row_ids = jax.lax.broadcasted_iota(jnp.int32, (r, tile_m), 0)
    pool = jnp.where(row_ids == own_ref[...], wgt_ref[...], 0.0)   # [R, tile_m]
    # bf16 x bf16 pooling contraction (0/1 weights are exact in bf16); hides under
    # the main [tile_m,H]x[H,tile_h] matmul instead of an emulated f32 MXU pass.
    o_ref[...] += jnp.dot(pool.astype(jnp.bfloat16), hid.astype(jnp.bfloat16),
                          preferred_element_type=jnp.float32)


def _maha_kernel(x_ref, mu_ref, cinv_ref, mq_ref, o_ref):
    # x: [1, bs, H] prelogits for this task; mu: [1, H, C] class means (transposed);
    # cinv: [H, H]; mq: [1, 1, C] precomputed diag(mu @ cinv @ mu^T)
    # o: [1, bs, C]  (C on the lane axis -> lane-dense stores; min/argmin in JAX)
    x = x_ref[0]                                                         # [bs, H]
    xm = jnp.dot(x, cinv_ref[...], preferred_element_type=jnp.float32)   # [bs, H]
    q = jnp.sum(xm * x, axis=-1, keepdims=True)                          # [bs, 1]
    cross = jnp.dot(xm, mu_ref[0], preferred_element_type=jnp.float32)   # [bs, C]
    o_ref[...] = (q - 2.0 * cross + mq_ref[0])[None]                     # [1, bs, C]


# ------------------------------ kernel wrappers -----------------------------

def encode_rows_pooled(x_rows, w_bf16, b_row, owner, weight, num_out_rows,
                       *, tile_m_target=512):
    """out[r] = sum_{i: owner[i] == r} weight[i] * tanh(x_rows[i] @ W + b).

    x_rows: [M, H] token rows (cast to bf16 for the MXU)
    owner:  [M]    int32 owner row (-1 -> contributes nowhere)
    weight: [M]    f32 pooling weight
    returns [num_out_rows, H] f32, accumulated in f32.
    tile_m_target: sweep 512 (v7x, 64 MiB VMEM) vs 1024 (v5e/v6e, 128 MiB VMEM).
    """
    M, H = x_rows.shape
    R = num_out_rows

    # ---- row tiling: pad M to a tile multiple; padded rows have owner = -1 ----
    if M <= tile_m_target:
        tile_m, m_pad = M, M                    # full-dim block (always legal)
    else:
        tile_m = max((tile_m_target // 128) * 128, 128)
        m_pad = ((M + tile_m - 1) // tile_m) * tile_m
    if m_pad != M:
        pad = m_pad - M
        x_rows = jnp.pad(x_rows, ((0, pad), (0, 0)))
        owner = jnp.pad(owner, (0, pad), constant_values=-1)
        weight = jnp.pad(weight, (0, pad))
    nm = m_pad // tile_m

    # ---- optional output-column split (keeps v7x's second TensorCore busy) ----
    if H >= 512 and H % 256 == 0:
        nh, tile_h = 2, H // 2
    else:
        nh, tile_h = 1, H

    cp = dict(dimension_semantics=("parallel", "arbitrary"))
    est_vmem = (2 * tile_m * H * 2            # x tile, double-buffered bf16
                + 2 * H * tile_h * 2          # W column block, double-buffered bf16
                + R * tile_h * 4              # resident f32 accumulator output
                + 2 * tile_m * tile_h * 4)    # hid intermediate headroom
    if est_vmem > 30 * 1024 * 1024:           # only raise scoped VMEM when needed
        cp["vmem_limit_bytes"] = int(min(est_vmem * 2, 64 * 1024 * 1024))

    return pl.pallas_call(
        _encode_pool_kernel,
        grid=(nh, nm),
        in_specs=[
            pl.BlockSpec((tile_m, H), lambda h, m: (m, 0)),    # tokens, tiled rows
            pl.BlockSpec((H, tile_h), lambda h, m: (0, h)),    # W column block
            pl.BlockSpec((1, tile_h), lambda h, m: (0, h)),    # bias
            pl.BlockSpec((1, tile_m), lambda h, m: (0, m)),    # owner ids
            pl.BlockSpec((1, tile_m), lambda h, m: (0, m)),    # pooling weights
        ],
        out_specs=pl.BlockSpec((R, tile_h), lambda h, m: (0, h)),
        out_shape=jax.ShapeDtypeStruct((R, H), jnp.float32),
        compiler_params=pltpu.CompilerParams(**cp),
    )(x_rows.astype(jnp.bfloat16), w_bf16, b_row,
      owner.reshape(1, m_pad).astype(jnp.int32),
      weight.reshape(1, m_pad).astype(jnp.float32))


def maha_scores(prelogits, means_hc, cov_inv, mu_quad):
    """Mahalanobis quadratic form per (task, example, class).

    prelogits: [T, bs, H]; means_hc: [T, H, C]; cov_inv: [H, H]; mu_quad: [T, C]
    returns [T, bs, C] scores (min over C / argmin over T done in JAX).
    """
    T, bs, H = prelogits.shape
    C = means_hc.shape[2]
    return pl.pallas_call(
        _maha_kernel,
        grid=(T,),
        in_specs=[
            pl.BlockSpec((1, bs, H), lambda t: (t, 0, 0)),
            pl.BlockSpec((1, H, C), lambda t: (t, 0, 0)),
            pl.BlockSpec((H, H), lambda t: (0, 0)),
            pl.BlockSpec((1, 1, C), lambda t: (t, 0, 0)),
        ],
        out_specs=pl.BlockSpec((1, bs, C), lambda t: (t, 0, 0)),
        out_shape=jax.ShapeDtypeStruct((T, bs, C), jnp.float32),
        compiler_params=pltpu.CompilerParams(
            dimension_semantics=("parallel",)),          # tasks are independent
    )(prelogits, means_hc, cov_inv, mu_quad.reshape(T, 1, C))


# ------------------------------- JAX glue ----------------------------------

def init_params(key, vocab_size, hidden, pre_seq_len, num_tasks, num_labels):
    ks = jax.random.split(key, 5)
    emb = jax.random.normal(ks[0], (vocab_size, hidden), jnp.float32) * 0.02
    enc_w = jax.random.normal(ks[1], (hidden, hidden), jnp.float32) * 0.1
    enc_b = jnp.zeros((hidden,), jnp.float32)
    prompts = jax.random.normal(ks[2], (num_tasks, pre_seq_len, hidden),
                                jnp.float32) * 0.02
    means = jax.random.normal(ks[3], (num_tasks, num_labels, hidden), jnp.float32)
    a = jax.random.normal(ks[4], (hidden, hidden), jnp.float32) * 0.05
    cov_inv = a @ a.T + jnp.eye(hidden, dtype=jnp.float32)   # SPD stand-in for pinv
    return dict(embedding=emb, enc_w=enc_w, enc_b=enc_b, prompts=prompts,
                task_means=means, cov_inv=cov_inv)


def prepare_params(params):
    """Param-only precomputation hoisted out of the jitted forward."""
    p = dict(params)
    p["enc_w_bf16"] = params["enc_w"].astype(jnp.bfloat16)
    p["means_hc"] = params["task_means"].transpose(0, 2, 1)          # [T, H, C]
    p["mu_quad"] = jnp.einsum("tch,hk,tck->tc", params["task_means"],
                              params["cov_inv"], params["task_means"])  # [T, C]
    return p


@functools.partial(jax.jit, static_argnums=(3, 4))
def epi_forward(params, input_ids, attention_mask, pre_seq_len, num_tasks):
    """Eval-mode forward: prompt_mode='prompt', rep_mode='avg', query_mode='maha_ft'."""
    bs, seq = input_ids.shape
    H = params["enc_w"].shape[0]
    psl = pre_seq_len

    # TODO(synk): the real module runs a frozen pretrained AutoModel here; a full
    # BERT stack is out of scope, so a single token-wise tanh projection stands in.
    w_bf = params["enc_w_bf16"]
    b_row = params["enc_b"].reshape(1, H).astype(jnp.float32)

    raw_emb = params["embedding"][input_ids]             # [bs, seq, H]
    attn_f = attention_mask.astype(jnp.float32)          # [bs, seq]
    denom = jnp.maximum(psl + jnp.sum(attn_f, axis=1, keepdims=True), 1e-9)  # [bs,1]
    b_idx = jnp.arange(bs)

    # Marker positions (+psl offset inside the prompted sequence; the token-wise
    # stand-in makes the hidden row depend only on the token embedding itself).
    # TODO(synk): if a marker id is absent, argmax falls back to position 0 silently
    # (the PyTorch code would raise/print); matches the previous version's behavior.
    e11 = jnp.argmax(input_ids == E11_ID, axis=1)
    e21 = jnp.argmax(input_ids == E21_ID, axis=1)
    marker_emb = jnp.stack([raw_emb[b_idx, e11], raw_emb[b_idx, e21]],
                           axis=1).reshape(2 * bs, H)    # rows: (b, {e11,e21})

    # ---- single fused encode pass -------------------------------------------
    # rows = [bs*seq sequence tokens (b-major)] ++ [num_tasks*psl prompt tokens
    # (t-major)] ++ [2*bs marker-token copies].  Output rows:
    #   [0, bs)              masked per-example sequence sums
    #   [bs, bs+T)           per-task prompt sums (query prompt is batch-shared)
    #   [bs+T, bs+T+2*bs)    marker-token hidden rows (one-hot selection)
    n_seq, n_pr, n_mk = bs * seq, num_tasks * psl, 2 * bs
    R = bs + num_tasks + n_mk
    x_all = jnp.concatenate(
        [raw_emb.reshape(n_seq, H),
         params["prompts"].reshape(n_pr, H),
         marker_emb], axis=0)
    owner = jnp.concatenate([
        jnp.repeat(jnp.arange(bs, dtype=jnp.int32), seq),
        bs + jnp.repeat(jnp.arange(num_tasks, dtype=jnp.int32), psl),
        bs + num_tasks + jnp.arange(n_mk, dtype=jnp.int32)])
    weight = jnp.concatenate([
        attn_f.reshape(n_seq),
        jnp.ones((n_pr,), jnp.float32),
        jnp.ones((n_mk,), jnp.float32)])

    sums = encode_rows_pooled(x_all, w_bf, b_row, owner, weight, R)   # [R, H] f32
    seq_sums = sums[:bs]                        # [bs, H]
    prompt_sums = sums[bs:bs + num_tasks]       # [T, H]
    marker_hidden = sums[bs + num_tasks:]       # [2*bs, H]

    # per-(task, example) query prelogits; dropout is identity in eval mode
    prelogits_q = (prompt_sums[:, None, :] + seq_sums[None, :, :]) / denom[None]

    # ---- Mahalanobis prompt selection ----------------------------------------
    scores_full = maha_scores(prelogits_q, params["means_hc"],
                              params["cov_inv"], params["mu_quad"])   # [T, bs, C]
    scores_over_tasks = jnp.min(scores_full, axis=-1)                 # [T, bs]
    indices = jnp.argmin(scores_over_tasks, axis=0)                   # [bs]

    # ---- final pass with the selected prompt ----------------------------------
    # Under the token-wise stand-in the selected-prompt pass is exactly the query
    # quantities: pooled_output == prelogits_q[indices[b], b] and the marker hidden
    # rows are prompt-independent, so nothing is re-encoded.
    # TODO(synk): with a real (context-dependent) transformer encoder, re-encode
    # the selected-prompt sequence here instead of gathering.
    pooled_output = prelogits_q[indices, b_idx]                       # [bs, H]

    # ---- marker-token logits (ids 30522 / 30524) -------------------------------
    # TODO(synk): the PyTorch code references an undefined `output` variable; we
    # return the marker-token hidden states flattened per example, as intended.
    logits = marker_hidden.reshape(bs, 2 * H)

    return dict(logits=logits, prelogits=pooled_output,
                scores_over_tasks=scores_over_tasks, indices=indices,
                hidden_states=None, attentions=None)


if __name__ == "__main__":
    bs, seq, hidden = 2, 8, 32
    pre_seq_len, num_tasks, num_labels = 4, 3, 4
    vocab = 30528  # big enough to contain the 30522 / 30524 marker ids

    key = jax.random.PRNGKey(0)
    kp, ki = jax.random.split(key)
    params = prepare_params(
        init_params(kp, vocab, hidden, pre_seq_len, num_tasks, num_labels))

    input_ids = jax.random.randint(ki, (bs, seq), 0, 1000, dtype=jnp.int32)
    input_ids = input_ids.at[:, 2].set(E11_ID).at[:, 5].set(E21_ID)
    attention_mask = jnp.ones((bs, seq), dtype=jnp.int32)
    attention_mask = attention_mask.at[1, -2:].set(0)   # some padding on row 1

    out = epi_forward(params, input_ids, attention_mask, pre_seq_len, num_tasks)
    out = jax.tree_util.tree_map(lambda x: jax.block_until_ready(x), out)

    assert out["logits"].shape == (bs, 2 * hidden)
    assert out["prelogits"].shape == (bs, hidden)
    assert out["scores_over_tasks"].shape == (num_tasks, bs)
    assert out["indices"].shape == (bs,)
    assert bool(jnp.all(jnp.isfinite(out["logits"])))
    assert bool(jnp.all(jnp.isfinite(out["prelogits"])))
    assert bool(jnp.all(jnp.isfinite(out["scores_over_tasks"])))
    print("KERNEL_OK")
</pallas_src>

<mosaic_0001>
module attributes {stable_mosaic.version = 11 : i64} {
  func.func @_encode_pool_kernel(%arg0: i32, %arg1: i32, %arg2: memref<32x32xbf16, #tpu.memory_space<vmem>>, %arg3: memref<32x32xbf16, #tpu.memory_space<vmem>>, %arg4: memref<1x32xf32, #tpu.memory_space<vmem>>, %arg5: memref<1x32xi32, #tpu.memory_space<vmem>>, %arg6: memref<1x32xf32, #tpu.memory_space<vmem>>, %arg7: memref<9x32xf32, #tpu.memory_space<vmem>>) attributes {dimension_semantics = [#tpu.dimension_semantics<parallel>, #tpu.dimension_semantics<arbitrary>], iteration_bounds = array<i64: 1, 1>, scalar_prefetch = 0 : i64, scratch_operands = 0 : i64, tpu.core_type = #tpu.core_type<tc>, window_params = [{transform_indices = @transform_0, window_bounds = array<i64: 32, 32>}, {transform_indices = @transform_1, window_bounds = array<i64: 32, 32>}, {transform_indices = @transform_2, window_bounds = array<i64: 1, 32>}, {transform_indices = @transform_3, window_bounds = array<i64: 1, 32>}, {transform_indices = @transform_4, window_bounds = array<i64: 1, 32>}, {transform_indices = @transform_5, window_bounds = array<i64: 9, 32>}]} {
    %c0_i32 = arith.constant 0 : i32
    %0 = arith.cmpi eq, %arg1, %c0_i32 : i32
    %1 = arith.extui %0 : i1 to i32
    %c0_i32_0 = arith.constant 0 : i32
    %2 = arith.cmpi ne, %1, %c0_i32_0 : i32
    scf.if %2 {
      %cst_16 = arith.constant 0.000000e+00 : f32
      %25 = vector.broadcast %cst_16 : f32 to vector<9x32xf32>
      %c0_17 = arith.constant 0 : index
      %c0_18 = arith.constant 0 : index
      %26 = vector.load %arg7[%c0_17, %c0_18] : memref<9x32xf32, #tpu.memory_space<vmem>>, vector<9x32xf32>
      tpu.vector_store %arg7[%c0_17, %c0_18], %25 {strides = array<i32>} : memref<9x32xf32, #tpu.memory_space<vmem>>, vector<9x32xf32>,
    } else {
    }
    %c0 = arith.constant 0 : index
    %c0_1 = arith.constant 0 : index
    %3 = vector.load %arg2[%c0, %c0_1] : memref<32x32xbf16, #tpu.memory_space<vmem>>, vector<32x32xbf16>
    %c0_2 = arith.constant 0 : index
    %c0_3 = arith.constant 0 : index
    %4 = vector.load %arg3[%c0_2, %c0_3] : memref<32x32xbf16, #tpu.memory_space<vmem>>, vector<32x32xbf16>
    %cst = arith.constant dense<0.000000e+00> : vector<32x32xf32>
    %5 = tpu.matmul %3, %4, %cst {dimension_numbers = #tpu.dot_dimension_numbers<[1], [0], [0], [1], [0, 0, 1, 1], [], []>} : vector<32x32xbf16>, vector<32x32xbf16>, vector<32x32xf32> -> vector<32x32xf32>
    %c0_4 = arith.constant 0 : index
    %c0_5 = arith.constant 0 : index
    %6 = vector.load %arg4[%c0_4, %c0_5] : memref<1x32xf32, #tpu.memory_space<vmem>>, vector<1x32xf32>
    %7 = vector.broadcast %6 : vector<1x32xf32> to vector<32x32xf32>
    %8 = arith.addf %5, %7 : vector<32x32xf32>
    %9 = math.tanh %8 : vector<32x32xf32>
    %10 = tpu.iota {dimensions = array<i32: 0>} : vector<9x32xi32>
    %c0_6 = arith.constant 0 : index
    %c0_7 = arith.constant 0 : index
    %11 = vector.load %arg5[%c0_6, %c0_7] : memref<1x32xi32, #tpu.memory_space<vmem>>, vector<1x32xi32>
    %12 = vector.broadcast %11 : vector<1x32xi32> to vector<9x32xi32>
    %13 = arith.cmpi eq, %10, %12 : vector<9x32xi32>
    %c0_8 = arith.constant 0 : index
    %c0_9 = arith.constant 0 : index
    %14 = vector.load %arg6[%c0_8, %c0_9] : memref<1x32xf32, #tpu.memory_space<vmem>>, vector<1x32xf32>
    %cst_10 = arith.constant 0.000000e+00 : f32
    %15 = vector.shape_cast %14 : vector<1x32xf32> to vector<1x32xf32>
    %16 = vector.broadcast %15 : vector<1x32xf32> to vector<9x32xf32>
    %17 = vector.broadcast %cst_10 : f32 to vector<9x32xf32>
    %18 = arith.select %13, %16, %17 : vector<9x32xi1>, vector<9x32xf32>
    %c0_11 = arith.constant 0 : index
    %c0_12 = arith.constant 0 : index
    %19 = vector.load %arg7[%c0_11, %c0_12] : memref<9x32xf32, #tpu.memory_space<vmem>>, vector<9x32xf32>
    %20 = arith.truncf %18 : vector<9x32xf32> to vector<9x32xbf16>
    %21 = arith.truncf %9 : vector<32x32xf32> to vector<32x32xbf16>
    %cst_13 = arith.constant dense<0.000000e+00> : vector<9x32xf32>
    %22 = tpu.matmul %20, %21, %cst_13 {dimension_numbers = #tpu.dot_dimension_numbers<[1], [0], [0], [1], [0, 0, 1, 1], [], []>} : vector<9x32xbf16>, vector<32x32xbf16>, vector<9x32xf32> -> vector<9x32xf32>
    %23 = arith.addf %19, %22 : vector<9x32xf32>
    %c0_14 = arith.constant 0 : index
    %c0_15 = arith.constant 0 : index
    %24 = vector.load %arg7[%c0_14, %c0_15] : memref<9x32xf32, #tpu.memory_space<vmem>>, vector<9x32xf32>
    tpu.vector_store %arg7[%c0_14, %c0_15], %23 {strides = array<i32>} : memref<9x32xf32, #tpu.memory_space<vmem>>, vector<9x32xf32>,
    return
  }
  func.func @transform_0(%arg0: i32, %arg1: i32) -> (i32, i32) {
    %c0_i32 = arith.constant 0 : i32
    %c0_i32_0 = arith.constant 0 : i32
    return %arg1, %c0_i32 : i32, i32
  }
  func.func @transform_1(%arg0: i32, %arg1: i32) -> (i32, i32) {
    %c0_i32 = arith.constant 0 : i32
    %c0_i32_0 = arith.constant 0 : i32
    return %c0_i32, %arg0 : i32, i32
  }
  func.func @transform_2(%arg0: i32, %arg1: i32) -> (i32, i32) {
    %c0_i32 = arith.constant 0 : i32
    %c0_i32_0 = arith.constant 0 : i32
    return %c0_i32, %arg0 : i32, i32
  }
  func.func @transform_3(%arg0: i32, %arg1: i32) -> (i32, i32) {
    %c0_i32 = arith.constant 0 : i32
    %c0_i32_0 = arith.constant 0 : i32
    return %c0_i32, %arg1 : i32, i32
  }
  func.func @transform_4(%arg0: i32, %arg1: i32) -> (i32, i32) {
    %c0_i32 = arith.constant 0 : i32
    %c0_i32_0 = arith.constant 0 : i32
    return %c0_i32, %arg1 : i32, i32
  }
  func.func @transform_5(%arg0: i32, %arg1: i32) -> (i32, i32) {
    %c0_i32 = arith.constant 0 : i32
    %c0_i32_0 = arith.constant 0 : i32
    return %c0_i32, %arg0 : i32, i32
  }
}

module attributes {stable_mosaic.version = 11 : i64} {
  func.func @_maha_kernel(%arg0: i32, %arg1: memref<1x2x32xf32, #tpu.memory_space<vmem>>, %arg2: memref<1x32x4xf32, #tpu.memory_space<vmem>>, %arg3: memref<32x32xf32, #tpu.memory_space<vmem>>, %arg4: memref<1x1x4xf32, #tpu.memory_space<vmem>>, %arg5: memref<1x2x4xf32, #tpu.memory_space<vmem>>) attributes {dimension_semantics = [#tpu.dimension_semantics<parallel>], iteration_bounds = array<i64: 3>, scalar_prefetch = 0 : i64, scratch_operands = 0 : i64, tpu.core_type = #tpu.core_type<tc>, window_params = [{transform_indices = @transform_0, window_bounds = array<i64: 1, 2, 32>}, {transform_indices = @transform_1, window_bounds = array<i64: 1, 32, 4>}, {pipeline_mode = #tpu.pipeline_mode<synchronous>, transform_indices = @transform_2, window_bounds = array<i64: 32, 32>}, {transform_indices = @transform_3, window_bounds = array<i64: 1, 1, 4>}, {transform_indices = @transform_4, window_bounds = array<i64: 1, 2, 4>}]} {
    %c0 = arith.constant 0 : index
    %c0_0 = arith.constant 0 : index
    %c0_1 = arith.constant 0 : index
    %0 = vector.load %arg1[%c0, %c0_0, %c0_1] : memref<1x2x32xf32, #tpu.memory_space<vmem>>, vector<1x2x32xf32>
    %1 = vector.shape_cast %0 : vector<1x2x32xf32> to vector<2x32xf32>
    %c0_2 = arith.constant 0 : index
    %c0_3 = arith.constant 0 : index
    %2 = vector.load %arg3[%c0_2, %c0_3] : memref<32x32xf32, #tpu.memory_space<vmem>>, vector<32x32xf32>
    %cst = arith.constant dense<0.000000e+00> : vector<2x32xf32>
    %3 = tpu.matmul %1, %2, %cst {dimension_numbers = #tpu.dot_dimension_numbers<[1], [0], [0], [1], [0, 0, 1, 1], [], []>} : vector<2x32xf32>, vector<32x32xf32>, vector<2x32xf32> -> vector<2x32xf32>
    %4 = arith.mulf %3, %1 : vector<2x32xf32>
    %cst_4 = arith.constant dense<0.000000e+00> : vector<2xf32>
    %5 = vector.multi_reduction <add>, %4, %cst_4 [1] : vector<2x32xf32> to vector<2xf32>
    %6 = vector.shape_cast %5 : vector<2xf32> to vector<2x1xf32>
    %c0_5 = arith.constant 0 : index
    %c0_6 = arith.constant 0 : index
    %c0_7 = arith.constant 0 : index
    %7 = vector.load %arg2[%c0_5, %c0_6, %c0_7] : memref<1x32x4xf32, #tpu.memory_space<vmem>>, vector<1x32x4xf32>
    %8 = vector.shape_cast %7 : vector<1x32x4xf32> to vector<32x4xf32>
    %cst_8 = arith.constant dense<0.000000e+00> : vector<2x4xf32>
    %9 = tpu.matmul %3, %8, %cst_8 {dimension_numbers = #tpu.dot_dimension_numbers<[1], [0], [0], [1], [0, 0, 1, 1], [], []>} : vector<2x32xf32>, vector<32x4xf32>, vector<2x4xf32> -> vector<2x4xf32>
    %cst_9 = arith.constant 2.000000e+00 : f32
    %10 = vector.broadcast %cst_9 : f32 to vector<2x4xf32>
    %11 = arith.mulf %10, %9 : vector<2x4xf32>
    %12 = vector.broadcast %6 : vector<2x1xf32> to vector<2x4xf32>
    %13 = arith.subf %12, %11 : vector<2x4xf32>
    %c0_10 = arith.constant 0 : index
    %c0_11 = arith.constant 0 : index
    %c0_12 = arith.constant 0 : index
    %14 = vector.load %arg4[%c0_10, %c0_11, %c0_12] : memref<1x1x4xf32, #tpu.memory_space<vmem>>, vector<1x1x4xf32>
    %15 = vector.shape_cast %14 : vector<1x1x4xf32> to vector<1x4xf32>
    %16 = vector.broadcast %15 : vector<1x4xf32> to vector<2x4xf32>
    %17 = arith.addf %13, %16 : vector<2x4xf32>
    %18 = vector.shape_cast %17 : vector<2x4xf32> to vector<1x2x4xf32>
    %c0_13 = arith.constant 0 : index
    %c0_14 = arith.constant 0 : index
    %c0_15 = arith.constant 0 : index
    %19 = vector.load %arg5[%c0_13, %c0_14, %c0_15] : memref<1x2x4xf32, #tpu.memory_space<vmem>>, vector<1x2x4xf32>
    tpu.vector_store %arg5[%c0_13, %c0_14, %c0_15], %18 {strides = array<i32>} : memref<1x2x4xf32, #tpu.memory_space<vmem>>, vector<1x2x4xf32>,
    return
  }
  func.func @transform_0(%arg0: i32) -> (i32, i32, i32) {
    %c0_i32 = arith.constant 0 : i32
    %c0_i32_0 = arith.constant 0 : i32
    %c0_i32_1 = arith.constant 0 : i32
    return %arg0, %c0_i32, %c0_i32_0 : i32, i32, i32
  }
  func.func @transform_1(%arg0: i32) -> (i32, i32, i32) {
    %c0_i32 = arith.constant 0 : i32
    %c0_i32_0 = arith.constant 0 : i32
    %c0_i32_1 = arith.constant 0 : i32
    return %arg0, %c0_i32, %c0_i32_0 : i32, i32, i32
  }
  func.func @transform_2(%arg0: i32) -> (i32, i32) {
    %c0_i32 = arith.constant 0 : i32
    %c0_i32_0 = arith.constant 0 : i32
    %c0_i32_1 = arith.constant 0 : i32
    return %c0_i32, %c0_i32_0 : i32, i32
  }
  func.func @transform_3(%arg0: i32) -> (i32, i32, i32) {
    %c0_i32 = arith.constant 0 : i32
    %c0_i32_0 = arith.constant 0 : i32
    %c0_i32_1 = arith.constant 0 : i32
    return %arg0, %c0_i32, %c0_i32_0 : i32, i32, i32
  }
  func.func @transform_4(%arg0: i32) -> (i32, i32, i32) {
    %c0_i32 = arith.constant 0 : i32
    %c0_i32_0 = arith.constant 0 : i32
    %c0_i32_1 = arith.constant 0 : i32
    return %arg0, %c0_i32, %c0_i32_0 : i32, i32, i32
  }
}

</mosaic_0001>

<llo_original>
// kernel: epi_forward.3
$region0: #{epi_forward.3}
  #allocation0 [shape = 'u32[]', space=smem, size = 0x4, offset = 0x4, fixed_abs, tag = 'smem constant byte address 0x4 - core index']
  #allocation1 [shape = 'u32[144,128]{1,0:T(1,128)}', space=vmem, size = 0x12000, scoped, tag = 'internal scratch']
  %s0 = inlined_call_operand.vmem [shape: f32[3,2,32], index: 0, kind: input, shape index: {}]
  %s1 = inlined_call_operand.vmem [shape: f32[3,32,4], index: 1, kind: input, shape index: {}]
  %s2 = inlined_call_operand.vmem [shape: f32[32,32], index: 2, kind: input, shape index: {}]
  %s3 = inlined_call_operand.vmem [shape: f32[3,1,4], index: 3, kind: input, shape index: {}]
  %s4 = inlined_call_operand.vmem [shape: f32[3,2,4], index: 4, kind: output, shape index: {}]
  %s5 = sld [smem:[#allocation0]]
  $region49: #{epi_forward.3} parent=0
    _
  %s7 = ssub.s32 1, %s5
  %s8 = scalar_select 0, %s7, %s5
  loop: start=0, step=1, limit=5
  $region2: #{epi_forward.3} parent=0 // loop_pre_header
    _
  $region3: #{epi_forward.3} parent=0 // loop_header
    %s10 = sphi 0, %s14
    %p11 = scmp.ge.s32.totalorder %s10, 5
    %s20 = sphi 0, %s22
    %s23 = sphi 0, %s20
    %s24 = sphi 0, %s23
    %s40 = sphi 0, %s24
    %s46 = sphi 0, %s48
    %s49 = sphi 0, %s46
    %s50 = sphi 0, %s49
    %s66 = sphi 0, %s50
    %s70 = sphi 0, %s70
    %s72 = sphi 0, %s70
    %s73 = sphi 0, %s72
    %s87 = sphi 0, %s73
    %s93 = sphi 0, %s95
    %s96 = sphi 0, %s93
    %s97 = sphi 0, %s96
    %s113 = sphi 0, %s97
    %s119 = sphi 0, %s121
    %s122 = sphi 0, %s119
    %s123 = sphi 0, %s122
    %s139 = sphi 0, %s123
  $region4: #{epi_forward.3} parent=0 // loop_header_branch
    %13 = sbr.rel (%p11) target = $region8
  $region5: #{epi_forward.3} parent=0 // loop_body
    %s15 = ssub.s32 %s10, 1
    %s16 = ssub.s32 %s10, 2
    %s17 = sadd.s32 %s10, 1
    %s18 = ssub.s32 %s10, %s17
    %p19 = scmp.eq.s32.totalorder %s18, 0
    %s21 = sadd.s32 %s20, 1
    %s22 = scalar_select %p19, %s20, %s21
    %p25 = pneg %p19
    %p26 = scmp.eq.s32.totalorder %s10, 2
    %p27 = por %p25, %p26
    %p28 = scmp.ne.s32.totalorder %s20, %s23
    %p29 = scmp.eq.s32.totalorder %s10, 0
    %p30 = por %p28, %p29
    %p31 = scmp.ne.s32.totalorder %s20, %s23
    %p32 = scmp.eq.s32.totalorder %s15, 2
    %p33 = por %p31, %p32
    %p34 = scmp.ne.s32.totalorder %s23, %s24
    %p35 = scmp.eq.s32.totalorder %s15, 0
    %p36 = por %p34, %p35
    %p37 = scmp.ne.s32.totalorder %s23, %s24
    %p38 = scmp.eq.s32.totalorder %s16, 2
    %p39 = por %p37, %p38
    %p41 = scmp.ne.s32.totalorder %s24, %s40
    %p42 = scmp.eq.s32.totalorder %s16, 0
    %p43 = por %p41, %p42
    %s44 = ssub.s32 %s10, %s17
    %p45 = scmp.eq.s32.totalorder %s44, 0
    %s47 = sadd.s32 %s46, 1
    %s48 = scalar_select %p45, %s46, %s47
    %p51 = pneg %p45
    %p52 = scmp.eq.s32.totalorder %s10, 2
    %p53 = por %p51, %p52
    %p54 = scmp.ne.s32.totalorder %s46, %s49
    %p55 = scmp.eq.s32.totalorder %s10, 0
    %p56 = por %p54, %p55
    %p57 = scmp.ne.s32.totalorder %s46, %s49
    %p58 = scmp.eq.s32.totalorder %s15, 2
    %p59 = por %p57, %p58
    %p60 = scmp.ne.s32.totalorder %s49, %s50
    %p61 = scmp.eq.s32.totalorder %s15, 0
    %p62 = por %p60, %p61
    %p63 = scmp.ne.s32.totalorder %s49, %s50
    %p64 = scmp.eq.s32.totalorder %s16, 2
    %p65 = por %p63, %p64
    %p67 = scmp.ne.s32.totalorder %s50, %s66
    %p68 = scmp.eq.s32.totalorder %s16, 0
    %p69 = por %p67, %p68
    %s71 = sadd.s32 %s70, 1
    %p74 = scmp.eq.s32.totalorder %s10, 2
    %p75 = scmp.ne.s32.totalorder %s70, %s72
    %p76 = scmp.eq.s32.totalorder %s10, 0
    %p77 = por %p75, %p76
    %p78 = scmp.ne.s32.totalorder %s70, %s72
    %p79 = scmp.eq.s32.totalorder %s15, 2
    %p80 = por %p78, %p79
    %p81 = scmp.ne.s32.totalorder %s72, %s73
    %p82 = scmp.eq.s32.totalorder %s15, 0
    %p83 = por %p81, %p82
    %p84 = scmp.ne.s32.totalorder %s72, %s73
    %p85 = scmp.eq.s32.totalorder %s16, 2
    %p86 = por %p84, %p85
    %p88 = scmp.ne.s32.totalorder %s73, %s87
    %p89 = scmp.eq.s32.totalorder %s16, 0
    %p90 = por %p88, %p89
    %s91 = ssub.s32 %s10, %s17
    %p92 = scmp.eq.s32.totalorder %s91, 0
    %s94 = sadd.s32 %s93, 1
    %s95 = scalar_select %p92, %s93, %s94
    %p98 = pneg %p92
    %p99 = scmp.eq.s32.totalorder %s10, 2
    %p100 = por %p98, %p99
    %p101 = scmp.ne.s32.totalorder %s93, %s96
    %p102 = scmp.eq.s32.totalorder %s10, 0
    %p103 = por %p101, %p102
    %p104 = scmp.ne.s32.totalorder %s93, %s96
    %p105 = scmp.eq.s32.totalorder %s15, 2
    %p106 = por %p104, %p105
    %p107 = scmp.ne.s32.totalorder %s96, %s97
    %p108 = scmp.eq.s32.totalorder %s15, 0
    %p109 = por %p107, %p108
    %p110 = scmp.ne.s32.totalorder %s96, %s97
    %p111 = scmp.eq.s32.totalorder %s16, 2
    %p112 = por %p110, %p111
    %p114 = scmp.ne.s32.totalorder %s97, %s113
    %p115 = scmp.eq.s32.totalorder %s16, 0
    %p116 = por %p114, %p115
    %s117 = ssub.s32 %s10, %s17
    %p118 = scmp.eq.s32.totalorder %s117, 0
    %s120 = sadd.s32 %s119, 1
    %s121 = scalar_select %p118, %s119, %s120
    %p124 = pneg %p118
    %p125 = scmp.eq.s32.totalorder %s10, 2
    %p126 = por %p124, %p125
    %p127 = scmp.ne.s32.totalorder %s119, %s122
    %p128 = scmp.eq.s32.totalorder %s10, 0
    %p129 = por %p127, %p128
    %p130 = scmp.ne.s32.totalorder %s119, %s122
    %p131 = scmp.eq.s32.totalorder %s15, 2
    %p132 = por %p130, %p131
    %p133 = scmp.ne.s32.totalorder %s122, %s123
    %p134 = scmp.eq.s32.totalorder %s15, 0
    %p135 = por %p133, %p134
    %p136 = scmp.ne.s32.totalorder %s122, %s123
    %p137 = scmp.eq.s32.totalorder %s16, 2
    %p138 = por %p136, %p137
    %p140 = scmp.ne.s32.totalorder %s123, %s139
    %p141 = scmp.eq.s32.totalorder %s16, 0
    %p142 = por %p140, %p141
    %p143 = scmp.le.s32.totalorder 1, %s10
    %p144 = scmp.lt.s32.totalorder %s10, 4
    %p145 = pnand %p143, %p144
    %p146 = pneg %p145
    // Predicated region
    $region9: #{epi_forward.3} parent=5 // pred_check
      _
    $region10: #{epi_forward.3} parent=5 // pred_check_branch
      %148 = sbr.rel (%p145) target = $region12
    $region11: #{epi_forward.3} parent=5 // pred_region
      %s149 = ssub.s32 %s10, 1
      // Predicated region
      $region13: #{epi_forward.3} parent=11 // pred_check
        %p150 = pneg %p83
      $region14: #{epi_forward.3} parent=11 // pred_check_branch
        %152 = sbr.rel (%p150) target = $region16
      $region15: #{epi_forward.3} parent=11 // pred_region
        _
      $region16: #{epi_forward.3} parent=11 // pred_fallthru
        _
    $region12: #{epi_forward.3} parent=5 // pred_fallthru
      _
    %p153 = scmp.lt.s32.totalorder %s10, 3
    // Predicated region
    $region17: #{epi_forward.3} parent=5 // pred_check
      %p154 = pneg %p153
    $region18: #{epi_forward.3} parent=5 // pred_check_branch
      %156 = sbr.rel (%p154) target = $region20
    $region19: #{epi_forward.3} parent=5 // pred_region
      // Predicated region
      $region21: #{epi_forward.3} parent=19 // pred_check
        %p157 = pneg %p30
      $region22: #{epi_forward.3} parent=19 // pred_check_branch
        %159 = sbr.rel (%p157) target = $region24
      $region23: #{epi_forward.3} parent=19 // pred_region
        %p160 = scmp.lt.s32.totalorder %s10, 2
        %s161 = scalar_select %p160, %s10, 2
        %s162 = smul.addr %s161, 2
        %s163 = scalar_lea.vmem %s0, %s162
      $region24: #{epi_forward.3} parent=19 // pred_fallthru
        _
      // Predicated region
      $region25: #{epi_forward.3} parent=19 // pred_check
        %p164 = pneg %p56
      $region26: #{epi_forward.3} parent=19 // pred_check_branch
        %166 = sbr.rel (%p164) target = $region28
      $region27: #{epi_forward.3} parent=19 // pred_region
        %p167 = scmp.lt.s32.totalorder %s10, 2
        %s168 = scalar_select %p167, %s10, 2
        %s169 = smul.addr %s168, 4
        %s170 = smul.addr %s169, 8
        %s171 = scalar_lea.vmem %s1, %s170
      $region28: #{epi_forward.3} parent=19 // pred_fallthru
        _
      // Predicated region
      $region29: #{epi_forward.3} parent=19 // pred_check
        %p172 = pneg %p103
      $region30: #{epi_forward.3} parent=19 // pred_check_branch
        %174 = sbr.rel (%p172) target = $region32
      $region31: #{epi_forward.3} parent=19 // pred_region
        %p175 = scmp.lt.s32.totalorder %s10, 2
        %s176 = scalar_select %p175, %s10, 2
        %s177 = scalar_lea.vmem %s3, %s176
      $region32: #{epi_forward.3} parent=19 // pred_fallthru
        _
    $region20: #{epi_forward.3} parent=5 // pred_fallthru
      _
    %p178 = scmp.le.s32.totalorder 1, %s10
    %p179 = scmp.lt.s32.totalorder %s10, 4
    %p180 = pnand %p178, %p179
    %p181 = pneg %p180
    // Predicated region
    $region33: #{epi_forward.3} parent=5 // pred_check
      _
    $region34: #{epi_forward.3} parent=5 // pred_check_branch
      %183 = sbr.rel (%p180) target = $region36
    $region35: #{epi_forward.3} parent=5 // pred_region
      %s184 = ssub.s32 %s10, 1
      %p185 = scmp.lt.s32.totalorder %s15, 2
      %s186 = scalar_select %p185, %s15, 2
      %s187 = smul.addr %s186, 2
      %s188 = scalar_lea.vmem %s0, %s187
      %p189 = pneg %p36
      %p190 = pneg %p33
      %p191 = scmp.lt.s32.totalorder %s15, 2
      %s192 = scalar_select %p191, %s15, 2
      %s193 = smul.addr %s192, 4
      %s194 = smul.addr %s193, 8
      %s195 = scalar_lea.vmem %s1, %s194
      %p196 = pneg %p62
      %p197 = pneg %p59
      %p198 = pneg %p83
      %p199 = pneg %p80
      %p200 = scmp.lt.s32.totalorder %s15, 2
      %s201 = scalar_select %p200, %s15, 2
      %s202 = scalar_lea.vmem %s3, %s201
      %p203 = pneg %p109
      %p204 = pneg %p106
      %p205 = pneg %p135
      %p206 = pneg %p132
      %p207 = scmp.lt.s32.totalorder %s15, 2
      %s208 = scalar_select %p207, %s15, 2
      %s209 = smul.addr %s208, 2
      %s210 = scalar_lea.vmem %s4, %s209
      %p211 = scmp.lt.s32.totalorder %s15, 2
      %s212 = scalar_select %p211, %s15, 2
      %s213 = smul.addr %s212, 2
      %s214 = scalar_lea.vmem %s0, %s213
      %p215 = scmp.lt.s32.totalorder %s15, 2
      %s216 = scalar_select %p215, %s15, 2
      %s217 = smul.addr %s216, 4
      %s218 = smul.addr %s217, 8
      %s219 = scalar_lea.vmem %s1, %s218
      %p220 = scmp.lt.s32.totalorder %s15, 2
      %s221 = scalar_select %p220, %s15, 2
      %s222 = scalar_lea.vmem %s3, %s221
      %p223 = scmp.lt.s32.totalorder %s15, 2
      %s224 = scalar_select %p223, %s15, 2
      %s225 = smul.addr %s224, 2
      %s226 = scalar_lea.vmem %s4, %s225
      %v227 = vld [vmem:[%s214] sm:$0x3]
      %v228 = vld [vmem:[%s2] sm:$0xff]
      %v229 = vld [vmem:[%s2 + $0x8] sm:$0xff]
      %v230 = vld [vmem:[%s2 + $0x10] sm:$0xff]
      %v231 = vld [vmem:[%s2 + $0x18] sm:$0xff]
      %vm232 = vcmask 261120
      %v234 = vsel %vm232, %v227, 0
      %236 = vmatprep.subr.mxu0 0.0
      %237 = vmatpush1.msra.mxu0 %v228
      %238 = vmatprep.subr.mxu0 0.0
      %239 = vmatpush1.msra.mxu0 %v229
      %240 = vmatprep.subr.mxu0 0.0
      %241 = vmatpush1.msra.mxu0 %v230
      %242 = vmatprep.subr.mxu0 0.0
      %243 = vmatpush1.msra.mxu0 %v231
      %244 = vmatprep.subr.mxu0 0.0
      %245 = vmatpush1.msra.mxu0 0.0
      %246 = vmatprep.subr.mxu0 0.0
      %247 = vmatpush1.msra.mxu0 0.0
      %248 = vmatprep.subr.mxu0 0.0
      %249 = vmatpush1.msra.mxu0 0.0
      %250 = vmatprep.subr.mxu0 0.0
      %251 = vmatpush1.msra.mxu0 0.0
      %252 = vmatprep.subr.mxu0 0.0
      %253 = vmatpush1.msra.mxu0 0.0
      %254 = vmatprep.subr.mxu0 0.0
      %255 = vmatpush1.msra.mxu0 0.0
      %256 = vmatprep.subr.mxu0 0.0
      %257 = vmatpush1.msra.mxu0 0.0
      %258 = vmatprep.subr.mxu0 0.0
      %259 = vmatpush1.msra.mxu0 0.0
      %260 = vmatprep.subr.mxu0 0.0
      %261 = vmatpush1.msra.mxu0 0.0
      %262 = vmatprep.subr.mxu0 0.0
      %263 = vmatpush1.msra.mxu0 0.0
      %264 = vmatprep.subr.mxu0 0.0
      %265 = vmatpush1.msra.mxu0 0.0
      %266 = vmatprep.subr.mxu0 0.0
      %267 = vmatpush1.msra.mxu0 0.0
      %268 = vmatprep.subr.mxu0 0.0
      %269 = vmatpush1.msra.mxu0 0.0
      %270 = vmatprep.subr.mxu0 0.0
      %271 = vmatpush1.msra.mxu0 0.0
      %272 = vmatprep.subr.mxu0 0.0
      %273 = vmatpush1.msra.mxu0 0.0
      %274 = vmatprep.subr.mxu0 0.0
      %275 = vmatpush1.msra.mxu0 0.0
      %276 = vmatprep.subr.mxu0 0.0
      %277 = vmatpush1.msra.mxu0 0.0
      %278 = vmatprep.subr.mxu0 0.0
      %279 = vmatpush1.msra.mxu0 0.0
      %280 = vmatprep.subr.mxu0 0.0
      %281 = vmatpush1.msra.mxu0 0.0
      %282 = vmatprep.subr.mxu0 0.0
      %283 = vmatpush1.msra.mxu0 0.0
      %284 = vmatprep.subr.mxu0 0.0
      %285 = vmatpush1.msra.mxu0 0.0
      %286 = vmatprep.subr.mxu0 0.0
      %287 = vmatpush1.msra.mxu0 0.0
      %288 = vmatprep.subr.mxu0 0.0
      %289 = vmatpush1.msra.mxu0 0.0
      %290 = vmatprep.subr.mxu0 0.0
      %291 = vmatpush1.msra.mxu0 0.0
      %292 = vmatprep.subr.mxu0 0.0
      %293 = vmatpush1.msra.mxu0 0.0
      %294 = vmatprep.subr.mxu0 0.0
      %295 = vmatpush1.msra.mxu0 0.0
      %296 = vmatprep.subr.mxu0 0.0
      %297 = vmatpush1.msra.mxu0 0.0
      %298 = vmatprep.subr.mxu0 0.0
      %299 = vmatpush1.msra.mxu0 0.0
      %300 = vmatprep.mubr.f32.mxu0 0.0
      %301 = vmatmul.mubr.f32.gmra.mrb[0].mxu0 %v234
      %v302 = vpop.f32.mrb[0].mxu0
      %v303 = vadd.f32 0.0, %v302
      %v304 = vpop.f32.mrb[0].mxu0
      %305 = vdwg.mxu0
      %v306 = vmul.f32 %v303, %v227
      %vm307 = vcmask 254976
      %v308 = vsel %vm307, %v306, 0.0
      %309 = vadd.xlane.f32.xlu0 %v308
      %v310 = vpop.xlane.xlu0 %309
      %v311 = vld [vmem:[%s219] sm:$0xff]
      %v312 = vld [vmem:[%s219 + $0x8] sm:$0xff]
      %v313 = vld [vmem:[%s219 + $0x10] sm:$0xff]
      %v314 = vld [vmem:[%s219 + $0x18] sm:$0xff]
      %v316 = vsel %vm232, %v303, 0
      %318 = vmatprep.subr.mxu0 0.0
      %319 = vmatpush1.msra.mxu0 %v311
      %320 = vmatprep.subr.mxu0 0.0
      %321 = vmatpush1.msra.mxu0 %v312
      %322 = vmatprep.subr.mxu0 0.0
      %323 = vmatpush1.msra.mxu0 %v313
      %324 = vmatprep.subr.mxu0 0.0
      %325 = vmatpush1.msra.mxu0 %v314
      %326 = vmatprep.subr.mxu0 0.0
      %327 = vmatpush1.msra.mxu0 0.0
      %328 = vmatprep.subr.mxu0 0.0
      %329 = vmatpush1.msra.mxu0 0.0
      %330 = vmatprep.subr.mxu0 0.0
      %331 = vmatpush1.msra.mxu0 0.0
      %332 = vmatprep.subr.mxu0 0.0
      %333 = vmatpush1.msra.mxu0 0.0
      %334 = vmatprep.subr.mxu0 0.0
      %335 = vmatpush1.msra.mxu0 0.0
      %336 = vmatprep.subr.mxu0 0.0
      %337 = vmatpush1.msra.mxu0 0.0
      %338 = vmatprep.subr.mxu0 0.0
      %339 = vmatpush1.msra.mxu0 0.0
      %340 = vmatprep.subr.mxu0 0.0
      %341 = vmatpush1.msra.mxu0 0.0
      %342 = vmatprep.subr.mxu0 0.0
      %343 = vmatpush1.msra.mxu0 0.0
      %344 = vmatprep.subr.mxu0 0.0
      %345 = vmatpush1.msra.mxu0 0.0
      %346 = vmatprep.subr.mxu0 0.0
      %347 = vmatpush1.msra.mxu0 0.0
      %348 = vmatprep.subr.mxu0 0.0
      %349 = vmatpush1.msra.mxu0 0.0
      %350 = vmatprep.subr.mxu0 0.0
      %351 = vmatpush1.msra.mxu0 0.0
      %352 = vmatprep.subr.mxu0 0.0
      %353 = vmatpush1.msra.mxu0 0.0
      %354 = vmatprep.subr.mxu0 0.0
      %355 = vmatpush1.msra.mxu0 0.0
      %356 = vmatprep.subr.mxu0 0.0
      %357 = vmatpush1.msra.mxu0 0.0
      %358 = vmatprep.subr.mxu0 0.0
      %359 = vmatpush1.msra.mxu0 0.0
      %360 = vmatprep.subr.mxu0 0.0
      %361 = vmatpush1.msra.mxu0 0.0
      %362 = vmatprep.subr.mxu0 0.0
      %363 = vmatpush1.msra.mxu0 0.0
      %364 = vmatprep.subr.mxu0 0.0
      %365 = vmatpush1.msra.mxu0 0.0
      %366 = vmatprep.subr.mxu0 0.0
      %367 = vmatpush1.msra.mxu0 0.0
      %368 = vmatprep.subr.mxu0 0.0
      %369 = vmatpush1.msra.mxu0 0.0
      %370 = vmatprep.subr.mxu0 0.0
      %371 = vmatpush1.msra.mxu0 0.0
      %372 = vmatprep.subr.mxu0 0.0
      %373 = vmatpush1.msra.mxu0 0.0
      %374 = vmatprep.subr.mxu0 0.0
      %375 = vmatpush1.msra.mxu0 0.0
      %376 = vmatprep.subr.mxu0 0.0
      %377 = vmatpush1.msra.mxu0 0.0
      %378 = vmatprep.subr.mxu0 0.0
      %379 = vmatpush1.msra.mxu0 0.0
      %380 = vmatprep.subr.mxu0 0.0
      %381 = vmatpush1.msra.mxu0 0.0
      %382 = vmatprep.mubr.f32.mxu0 0.0
      %383 = vmatmul.mubr.f32.gmra.mrb[0].mxu0 %v316
      %v384 = vpop.f32.mrb[0].mxu0
      %v385 = vadd.f32 0.0, %v384
      %v386 = vpop.f32.mrb[0].mxu0
      %387 = vdwg.mxu0
      %v388 = vmul.f32 %v385, 2.0
      %v389 = vsub.f32 %v310, %v388
      %v390 = vld [vmem:[%s222] sm:$0x1]
      %v392 = vlaneseq
      %v393 = vshrl.u32 %v392, 7
      %v394 = vsub.s32 0, %v393
      %v395 = vrot.slane %v390, %v394
      %v397 = vadd.f32 %v389, %v395
      %vm398 = vcmask 25600
      %399 = vst.msk [vmem:[%s226] sm:$0x3] %vm398, %v397
      %p400 = scmp.lt.s32.totalorder %s15, 2
      %s401 = scalar_select %p400, %s15, 2
      %s402 = smul.addr %s401, 2
      %s403 = scalar_lea.vmem %s4, %s402
      // Predicated region
      $region37: #{epi_forward.3} parent=35 // pred_check
        %p404 = pneg %p132
      $region38: #{epi_forward.3} parent=35 // pred_check_branch
        %406 = sbr.rel (%p404) target = $region40
      $region39: #{epi_forward.3} parent=35 // pred_region
        _
      $region40: #{epi_forward.3} parent=35 // pred_fallthru
        _
    $region36: #{epi_forward.3} parent=5 // pred_fallthru
      _
    %p407 = scmp.le.s32.totalorder 2, %s10
    // Predicated region
    $region41: #{epi_forward.3} parent=5 // pred_check
      %p408 = pneg %p407
    $region42: #{epi_forward.3} parent=5 // pred_check_branch
      %410 = sbr.rel (%p408) target = $region44
    $region43: #{epi_forward.3} parent=5 // pred_region
      %s411 = ssub.s32 %s10, 2
      // Predicated region
      $region45: #{epi_forward.3} parent=43 // pred_check
        %p412 = pneg %p138
      $region46: #{epi_forward.3} parent=43 // pred_check_branch
        %414 = sbr.rel (%p412) target = $region48
      $region47: #{epi_forward.3} parent=43 // pred_region
        %p415 = scmp.lt.s32.totalorder %s16, 2
        %s416 = scalar_select %p415, %s16, 2
        %s417 = smul.addr %s416, 2
        %s418 = scalar_lea.vmem %s4, %s417
      $region48: #{epi_forward.3} parent=43 // pred_fallthru
        _
    $region44: #{epi_forward.3} parent=5 // pred_fallthru
      _
  $region6: #{epi_forward.3} parent=0 // loop_footer
    %s14 = sadd.s32 1, %s10
  $region7: #{epi_forward.3} parent=0 // loop_footer_branch
    %9 = sbr.rel target = $region3
  $region8: #{epi_forward.3} parent=0 // loop_exit
    _

// kernel: epi_forward.2
$region0: #{epi_forward.2}
  #allocation0 [shape = 'u32[]', space=smem, size = 0x4, offset = 0x4, fixed_abs, tag = 'smem constant byte address 0x4 - core index']
  #allocation1 [shape = 'u32[144,128]{1,0:T(1,128)}', space=vmem, size = 0x12000, scoped, tag = 'internal scratch']
  %s0 = inlined_call_operand.vmem [shape: bf16[32,32], index: 0, kind: input, shape index: {}]
  %s1 = inlined_call_operand.vmem [shape: bf16[32,32], index: 1, kind: input, shape index: {}]
  %s2 = inlined_call_operand.vmem [shape: f32[1,32], index: 2, kind: input, shape index: {}]
  %s3 = inlined_call_operand.vmem [shape: s32[1,32], index: 3, kind: input, shape index: {}]
  %s4 = inlined_call_operand.vmem [shape: f32[1,32], index: 4, kind: input, shape index: {}]
  %s5 = inlined_call_operand.vmem [shape: f32[9,32], index: 5, kind: output, shape index: {}]
  %s6 = sld [smem:[#allocation0]]
  $region34: #{epi_forward.2} parent=0
    _
  %s8 = ssub.s32 1, %s6
  %s9 = scalar_select 0, %s8, %s6
  // Predicated region
  $region2: #{epi_forward.2} parent=0 // pred_check
    _
  $region3: #{epi_forward.2} parent=0 // pred_check_branch
    %11 = sbr.rel (0) target = $region5
  $region4: #{epi_forward.2} parent=0 // pred_region
    _
  $region5: #{epi_forward.2} parent=0 // pred_fallthru
    _
  // Predicated region
  $region6: #{epi_forward.2} parent=0 // pred_check
    _
  $region7: #{epi_forward.2} parent=0 // pred_check_branch
    %13 = sbr.rel (0) target = $region9
  $region8: #{epi_forward.2} parent=0 // pred_region
    _
  $region9: #{epi_forward.2} parent=0 // pred_fallthru
    _
  // Predicated region
  $region10: #{epi_forward.2} parent=0 // pred_check
    _
  $region11: #{epi_forward.2} parent=0 // pred_check_branch
    %15 = sbr.rel (0) target = $region13
  $region12: #{epi_forward.2} parent=0 // pred_region
    _
  $region13: #{epi_forward.2} parent=0 // pred_fallthru
    _
  // Predicated region
  $region14: #{epi_forward.2} parent=0 // pred_check
    _
  $region15: #{epi_forward.2} parent=0 // pred_check_branch
    %17 = sbr.rel (0) target = $region17
  $region16: #{epi_forward.2} parent=0 // pred_region
    _
  $region17: #{epi_forward.2} parent=0 // pred_fallthru
    _
  // Predicated region
  $region18: #{epi_forward.2} parent=0 // pred_check
    _
  $region19: #{epi_forward.2} parent=0 // pred_check_branch
    %19 = sbr.rel (0) target = $region21
  $region20: #{epi_forward.2} parent=0 // pred_region
    _
  $region21: #{epi_forward.2} parent=0 // pred_fallthru
    _
  %p21 = scmp.eq.s32.totalorder 0, 0
  // Predicated region
  $region22: #{epi_forward.2} parent=0 // pred_check
    %p22 = pneg %p21
  $region23: #{epi_forward.2} parent=0 // pred_check_branch
    %24 = sbr.rel (%p22) target = $region25
  $region24: #{epi_forward.2} parent=0 // pred_region
    %vm25 = vcmask 261120
    %26 = vst.msk [vmem:[%s5] sm:$0xff] %vm25, 0.0
    %vm27 = vcmask 253952
    %28 = vst.msk [vmem:[%s5 + $0x8] sm:$0x1] %vm27, 0.0
  $region25: #{epi_forward.2} parent=0 // pred_fallthru
    _
  %v29 = vld [vmem:[%s0] sm:$0xf]
  %v30 = vld [vmem:[%s0 + $0x4] sm:$0xf]
  %v31 = vld [vmem:[%s0 + $0x8] sm:$0xf]
  %v32 = vld [vmem:[%s0 + $0xc] sm:$0xf]
  %v33 = vld [vmem:[%s1] sm:$0xf]
  %v34 = vld [vmem:[%s1 + $0x4] sm:$0xf]
  %v35 = vld [vmem:[%s1 + $0x8] sm:$0xf]
  %v36 = vld [vmem:[%s1 + $0xc] sm:$0xf]
  %v37 = vld [vmem:[%s2] sm:$0x1]
  %v39 = vlaneseq
  %v40 = vshrl.u32 %v39, 7
  %v41 = vsub.s32 0, %v40
  %v42 = vrot.slane %v37, %v41
  %v48 = vunpack.c.l.b16 %v29
  %v49 = vunpack.c.l.b16 %v30
  %v50 = vunpack.c.l.b16 %v31
  %v51 = vunpack.c.l.b16 %v32
  %v52 = vpack.c.b16 %v49, %v48
  %v53 = vpack.c.b16 %v51, %v50
  %v58 = vunpack.c.l.b16 %v33
  %v59 = vunpack.c.l.b16 %v34
  %v60 = vunpack.c.l.b16 %v35
  %v61 = vunpack.c.l.b16 %v36
  %v62 = vpack.c.b16 %v59, %v58
  %v63 = vpack.c.b16 %v61, %v60
  %vm66 = vcmask 261120
  %v68 = vsel %vm66, %v52, 0
  %v71 = vsel %vm66, %v53, 0
  %73 = vmatprep.subr.bf16.mxu0 0
  %74 = vmatpush1.bf16.msra.mxu0 %v62
  %75 = vmatprep.subr.bf16.mxu0 0
  %76 = vmatpush1.bf16.msra.mxu0 %v63
  %77 = vmatprep.subr.bf16.mxu0 0
  %78 = vmatpush1.bf16.msra.mxu0 0
  %79 = vmatprep.subr.bf16.mxu0 0
  %80 = vmatpush1.bf16.msra.mxu0 0
  %81 = vmatprep.subr.bf16.mxu0 0
  %82 = vmatpush1.bf16.msra.mxu0 0
  %83 = vmatprep.subr.bf16.mxu0 0
  %84 = vmatpush1.bf16.msra.mxu0 0
  %85 = vmatprep.subr.bf16.mxu0 0
  %86 = vmatpush1.bf16.msra.mxu0 0
  %87 = vmatprep.subr.bf16.mxu0 0
  %88 = vmatpush1.bf16.msra.mxu0 0
  %89 = vmatprep.subr.bf16.mxu0 0
  %90 = vmatpush1.bf16.msra.mxu0 0
  %91 = vmatprep.subr.bf16.mxu0 0
  %92 = vmatpush1.bf16.msra.mxu0 0
  %93 = vmatprep.subr.bf16.mxu0 0
  %94 = vmatpush1.bf16.msra.mxu0 0
  %95 = vmatprep.subr.bf16.mxu0 0
  %96 = vmatpush1.bf16.msra.mxu0 0
  %97 = vmatprep.subr.bf16.mxu0 0
  %98 = vmatpush1.bf16.msra.mxu0 0
  %99 = vmatprep.subr.bf16.mxu0 0
  %100 = vmatpush1.bf16.msra.mxu0 0
  %101 = vmatprep.subr.bf16.mxu0 0
  %102 = vmatpush1.bf16.msra.mxu0 0
  %103 = vmatprep.subr.bf16.mxu0 0
  %104 = vmatpush1.bf16.msra.mxu0 0
  %105 = vmatprep.mubr.bf16.mxu0 0
  %106 = vmatmul.mubr.bf16.gmra.mrb[0].mxu0 %v68
  %v107 = vpop.f32.mrb[0].mxu0
  %v108 = vadd.f32 %v42, %v107
  %v109 = vpop.f32.mrb[0].mxu0
  %v110 = vpop.f32.mrb[0].mxu0
  %v111 = vadd.f32 %v42, %v110
  %v112 = vpop.f32.mrb[0].mxu0
  %113 = vmatprep.mubr.bf16.mxu0 0
  %114 = vmatmul.mubr.bf16.gmra.mrb[0].mxu0 %v71
  %v115 = vpop.f32.mrb[0].mxu0
  %v116 = vadd.f32 %v42, %v115
  %v117 = vpop.f32.mrb[0].mxu0
  %v118 = vpop.f32.mrb[0].mxu0
  %v119 = vadd.f32 %v42, %v118
  %v120 = vpop.f32.mrb[0].mxu0
  %121 = vdwg.mxu0
  %v122 = vtanh.pop %v108
  %v123 = vtanh.pop %v111
  %v124 = vtanh.pop %v116
  %v125 = vtanh.pop %v119
  %v126 = vlaneseq
  %v127 = vshrl.u32 %v126, 7
  %v128 = vadd.s32 %v127, 8
  %v129 = vld [vmem:[%s3] sm:$0x1]
  %v130 = vlaneseq
  %v131 = vshrl.u32 %v130, 7
  %v132 = vsub.s32 0, %v131
  %v133 = vrot.slane %v129, %v132
  %vm134 = vcmp.eq.s32.totalorder %v127, %v133
  %vm135 = vcmp.eq.s32.totalorder %v128, %v133
  %v136 = vld [vmem:[%s4] sm:$0x1]
  %v138 = vlaneseq
  %v139 = vshrl.u32 %v138, 7
  %v140 = vsub.s32 0, %v139
  %v141 = vrot.slane %v136, %v140
  %v143 = vsel %vm134, %v141, 0.0
  %v144 = vsel %vm135, %v141, 0.0
  %v145 = vld [vmem:[%s5] sm:$0xff]
  %v146 = vld [vmem:[%s5 + $0x8] sm:$0x1]
  %v147 = vpack.c.bf16 %v144, %v143
  %v148 = vpack.c.bf16 %v123, %v122
  %v149 = vpack.c.bf16 %v125, %v124
  %v151 = vsel %vm66, %v147, 0
  %153 = vmatprep.subr.bf16.mxu0 0
  %154 = vmatpush1.bf16.msra.mxu0 %v148
  %155 = vmatprep.subr.bf16.mxu0 0
  %156 = vmatpush1.bf16.msra.mxu0 %v149
  %157 = vmatprep.subr.bf16.mxu0 0
  %158 = vmatpush1.bf16.msra.mxu0 0
  %159 = vmatprep.subr.bf16.mxu0 0
  %160 = vmatpush1.bf16.msra.mxu0 0
  %161 = vmatprep.subr.bf16.mxu0 0
  %162 = vmatpush1.bf16.msra.mxu0 0
  %163 = vmatprep.subr.bf16.mxu0 0
  %164 = vmatpush1.bf16.msra.mxu0 0
  %165 = vmatprep.subr.bf16.mxu0 0
  %166 = vmatpush1.bf16.msra.mxu0 0
  %167 = vmatprep.subr.bf16.mxu0 0
  %168 = vmatpush1.bf16.msra.mxu0 0
  %169 = vmatprep.subr.bf16.mxu0 0
  %170 = vmatpush1.bf16.msra.mxu0 0
  %171 = vmatprep.subr.bf16.mxu0 0
  %172 = vmatpush1.bf16.msra.mxu0 0
  %173 = vmatprep.subr.bf16.mxu0 0
  %174 = vmatpush1.bf16.msra.mxu0 0
  %175 = vmatprep.subr.bf16.mxu0 0
  %176 = vmatpush1.bf16.msra.mxu0 0
  %177 = vmatprep.subr.bf16.mxu0 0
  %178 = vmatpush1.bf16.msra.mxu0 0
  %179 = vmatprep.subr.bf16.mxu0 0
  %180 = vmatpush1.bf16.msra.mxu0 0
  %181 = vmatprep.subr.bf16.mxu0 0
  %182 = vmatpush1.bf16.msra.mxu0 0
  %183 = vmatprep.subr.bf16.mxu0 0
  %184 = vmatpush1.bf16.msra.mxu0 0
  %185 = vmatprep.mubr.bf16.mxu0 0
  %186 = vmatmul.mubr.bf16.gmra.mrb[0].mxu0 %v151
  %v187 = vpop.f32.mrb[0].mxu0
  %v188 = vadd.f32 0.0, %v187
  %v189 = vpop.f32.mrb[0].mxu0
  %v190 = vpop.f32.mrb[0].mxu0
  %v191 = vadd.f32 0.0, %v190
  %v192 = vpop.f32.mrb[0].mxu0
  %193 = vdwg.mxu0
  %v194 = vadd.f32 %v145, %v188
  %v195 = vadd.f32 %v146, %v191
  %196 = vst.msk [vmem:[%s5] sm:$0xff] %vm66, %v194
  %vm197 = vcmask 253952
  %198 = vst.msk [vmem:[%s5 + $0x8] sm:$0x1] %vm197, %v195
  // Predicated region
  $region26: #{epi_forward.2} parent=0 // pred_check
    _
  $region27: #{epi_forward.2} parent=0 // pred_check_branch
    %200 = sbr.rel (0) target = $region29
  $region28: #{epi_forward.2} parent=0 // pred_region
    _
  $region29: #{epi_forward.2} parent=0 // pred_fallthru
    _
  // Predicated region
  $region30: #{epi_forward.2} parent=0 // pred_check
    _
  $region31: #{epi_forward.2} parent=0 // pred_check_branch
    %202 = sbr.rel (0) target = $region33
  $region32: #{epi_forward.2} parent=0 // pred_region
    _
  $region33: #{epi_forward.2} parent=0 // pred_fallthru
    _

</llo_original>
